<compile_context>
chip_gen: v7x
topology: tpu7x:2x2x1
jax: 0.10.0
libtpu: 0.0.40
codegen_flags: <defaults>
</compile_context>

<pallas_src>
import jax
import jax.numpy as jnp
import numpy as np
from jax import lax
from jax.experimental import pallas as pl
from jax.experimental.pallas import tpu as pltpu


def _attention_kernel(x_ref, w_ref, b_ref, o_ref):
    """adaptive max pool + fused (depthwise*pointwise*BN) matmul + tanh + 1.

    x_ref : (fh*fw, K, NP)  pooling-window im2col slab, K = k*k*Cin, NP = N*Hout*Wout
    w_ref : (Cout, K)       fused weight (transposed so the output is lane-dense)
    b_ref : (Cout, 1)       fused bias
    o_ref : (Cout, NP)      output, spatial/batch axis on lanes
    """
    # adaptive max pool: elementwise max over the pooling-window axis (VPU)
    pooled = jnp.max(x_ref[...], axis=0)                                   # (K, NP)
    # one fused MXU matmul covering depthwise conv + pointwise conv + BN scale
    y = jnp.dot(w_ref[...], pooled, preferred_element_type=jnp.float32)    # (Cout, NP)
    y = y + b_ref[...]                                                     # fused bias
    o_ref[...] = (jnp.tanh(y) + 1.0).astype(o_ref.dtype)


def attention_forward(params, x_nchw, output_size, padding, eps=1e-5):
    """Pallas implementation of Attention.forward((x, output_size)) (eval-mode BN)."""
    w_dw, b_dw, w_pt, b_pt, gamma, beta, rmean, rvar = params
    N, Cin, H, W = x_nchw.shape
    Ho, Wo = output_size
    assert H % Ho == 0 and W % Wo == 0, "adaptive pool implemented for divisible sizes"
    fh, fw = H // Ho, W // Wo
    Cout, k = w_dw.shape[0], w_dw.shape[2]
    assert Cout % Cin == 0
    mult = Cout // Cin
    Hout = Ho + 2 * padding - k + 1
    Wout = Wo + 2 * padding - k + 1
    K = k * k * Cin
    NP = N * Hout * Wout

    # ---- layout plumbing (plain JAX, pure indexing): pooling-window im2col ----
    xb = x_nchw.reshape(N, Cin, Ho, fh, Wo, fw)
    # zero blocks at padded Ho/Wo positions: the in-kernel max over an all-zero
    # window is exactly 0, reproducing the zero padding applied AFTER the pool.
    xp = jnp.pad(xb, ((0, 0), (0, 0), (padding, padding), (0, 0),
                      (padding, padding), (0, 0)))
    wins = [xp[:, :, ki:ki + Hout, :, kj:kj + Wout, :]
            for ki in range(k) for kj in range(k)]
    xw = jnp.stack(wins, axis=0)                   # (k*k, N, Cin, Hout, fh, Wout, fw)
    xw = jnp.transpose(xw, (4, 6, 0, 2, 1, 3, 5))  # (fh, fw, k*k, Cin, N, Hout, Wout)
    x_slab = xw.reshape(fh * fw, K, NP)

    # ---- parameter folding (f32): depthwise @ pointwise * BN -> one weight ----
    # depthwise weight (Cout,1,k,k) -> block-diagonal full weight (k*k*Cin, Cout)
    w_dw_kkc = jnp.transpose(w_dw[:, 0], (1, 2, 0))                        # (k, k, Cout)
    mask = (jnp.arange(Cin)[:, None] == (jnp.arange(Cout) // mult)[None, :])
    w_full = (w_dw_kkc[:, :, None, :] * mask[None, None].astype(w_dw.dtype))
    w_full = w_full.reshape(K, Cout)                                       # (K, Cout)
    wp_mat = jnp.transpose(w_pt[:, :, 0, 0])                               # (Cout, Cout)
    bn_scale = gamma / jnp.sqrt(rvar + eps)
    bn_bias = beta - rmean * bn_scale
    w_fused = (w_full @ wp_mat) * bn_scale[None, :]                        # (K, Cout)
    b_fused = (b_dw @ wp_mat + b_pt) * bn_scale + bn_bias                  # (Cout,)

    out = pl.pallas_call(
        _attention_kernel,
        out_shape=jax.ShapeDtypeStruct((Cout, NP), jnp.float32),
        grid_spec=pltpu.PrefetchScalarGridSpec(
            num_scalar_prefetch=0,
            grid=(1,),                                   # whole problem in one step
            in_specs=[
                pl.BlockSpec((fh * fw, K, NP), lambda i: (0, 0, 0)),
                pl.BlockSpec((Cout, K), lambda i: (0, 0)),
                pl.BlockSpec((Cout, 1), lambda i: (0, 0)),
            ],
            out_specs=pl.BlockSpec((Cout, NP), lambda i: (0, 0)),
        ),
        compiler_params=pltpu.CompilerParams(dimension_semantics=("arbitrary",)),
    )(x_slab, jnp.transpose(w_fused), b_fused.reshape(Cout, 1))

    # (Cout, N*Hout*Wout) -> NCHW
    return jnp.transpose(out.reshape(Cout, N, Hout, Wout), (1, 0, 2, 3))


def attention_reference(params, x_nchw, output_size, padding, eps=1e-5):
    """Pure-JAX reference matching the PyTorch module (eval-mode BN)."""
    w_dw, b_dw, w_pt, b_pt, gamma, beta, rmean, rvar = params
    N, Cin, H, W = x_nchw.shape
    Ho, Wo = output_size
    fh, fw = H // Ho, W // Wo
    xp = x_nchw.reshape(N, Cin, Ho, fh, Wo, fw).max(axis=(3, 5))
    y = lax.conv_general_dilated(
        xp, w_dw, window_strides=(1, 1),
        padding=[(padding, padding), (padding, padding)],
        feature_group_count=Cin,
        dimension_numbers=("NCHW", "OIHW", "NCHW"))
    y = y + b_dw[None, :, None, None]
    y = lax.conv_general_dilated(
        y, w_pt, window_strides=(1, 1), padding=[(0, 0), (0, 0)],
        dimension_numbers=("NCHW", "OIHW", "NCHW"))
    y = y + b_pt[None, :, None, None]
    scale = gamma / jnp.sqrt(rvar + eps)
    bias = beta - rmean * scale
    y = y * scale[None, :, None, None] + bias[None, :, None, None]
    return jnp.tanh(y) + 1.0


if __name__ == "__main__":
    # module config
    in_channels, out_channels, kernel_size, padding = 4, 8, 3, 1
    N, H, W = 2, 16, 16
    output_size = (8, 8)

    key = jax.random.PRNGKey(0)
    ks = jax.random.split(key, 9)
    w_dw = 0.1 * jax.random.normal(ks[0], (out_channels, 1, kernel_size, kernel_size), jnp.float32)
    b_dw = 0.1 * jax.random.normal(ks[1], (out_channels,), jnp.float32)
    w_pt = 0.1 * jax.random.normal(ks[2], (out_channels, out_channels, 1, 1), jnp.float32)
    b_pt = 0.1 * jax.random.normal(ks[3], (out_channels,), jnp.float32)
    gamma = 1.0 + 0.1 * jax.random.normal(ks[4], (out_channels,), jnp.float32)
    beta = 0.1 * jax.random.normal(ks[5], (out_channels,), jnp.float32)
    rmean = 0.1 * jax.random.normal(ks[6], (out_channels,), jnp.float32)
    rvar = jnp.abs(1.0 + 0.1 * jax.random.normal(ks[7], (out_channels,), jnp.float32))
    x = jax.random.normal(ks[8], (N, in_channels, H, W), jnp.float32)

    params = (w_dw, b_dw, w_pt, b_pt, gamma, beta, rmean, rvar)

    out = attention_forward(params, x, output_size, padding)
    out = jax.block_until_ready(out)

    ref = attention_reference(params, x, output_size, padding)
    np.testing.assert_allclose(np.asarray(out), np.asarray(ref), rtol=1e-5, atol=1e-5)

    print("KERNEL_OK")
</pallas_src>

<mosaic_0001>
module attributes {stable_mosaic.version = 11 : i64} {
  func.func @_attention_kernel(%arg0: i32, %arg1: memref<4x36x128xf32, #tpu.memory_space<vmem>>, %arg2: memref<8x36xf32, #tpu.memory_space<vmem>>, %arg3: memref<8x1xf32, #tpu.memory_space<vmem>>, %arg4: memref<8x128xf32, #tpu.memory_space<vmem>>) attributes {dimension_semantics = [#tpu.dimension_semantics<arbitrary>], iteration_bounds = array<i64: 1>, scalar_prefetch = 0 : i64, scratch_operands = 0 : i64, tpu.core_type = #tpu.core_type<tc>, window_params = [{pipeline_mode = #tpu.pipeline_mode<synchronous>, transform_indices = @transform_0, window_bounds = array<i64: 4, 36, 128>}, {pipeline_mode = #tpu.pipeline_mode<synchronous>, transform_indices = @transform_1, window_bounds = array<i64: 8, 36>}, {pipeline_mode = #tpu.pipeline_mode<synchronous>, transform_indices = @transform_2, window_bounds = array<i64: 8, 1>}, {pipeline_mode = #tpu.pipeline_mode<synchronous>, transform_indices = @transform_3, window_bounds = array<i64: 8, 128>}]} {
    %c0 = arith.constant 0 : index
    %c0_0 = arith.constant 0 : index
    %c0_1 = arith.constant 0 : index
    %0 = vector.load %arg1[%c0, %c0_0, %c0_1] : memref<4x36x128xf32, #tpu.memory_space<vmem>>, vector<4x36x128xf32>
    %cst = arith.constant dense<0xFF800000> : vector<36x128xf32>
    %1 = vector.multi_reduction <maximumf>, %0, %cst [0] : vector<4x36x128xf32> to vector<36x128xf32>
    %c0_2 = arith.constant 0 : index
    %c0_3 = arith.constant 0 : index
    %2 = vector.load %arg2[%c0_2, %c0_3] : memref<8x36xf32, #tpu.memory_space<vmem>>, vector<8x36xf32>
    %cst_4 = arith.constant dense<0.000000e+00> : vector<8x128xf32>
    %3 = tpu.matmul %2, %1, %cst_4 {dimension_numbers = #tpu.dot_dimension_numbers<[1], [0], [0], [1], [0, 0, 1, 1], [], []>} : vector<8x36xf32>, vector<36x128xf32>, vector<8x128xf32> -> vector<8x128xf32>
    %c0_5 = arith.constant 0 : index
    %c0_6 = arith.constant 0 : index
    %4 = vector.load %arg3[%c0_5, %c0_6] : memref<8x1xf32, #tpu.memory_space<vmem>>, vector<8x1xf32>
    %5 = vector.broadcast %4 : vector<8x1xf32> to vector<8x128xf32>
    %6 = arith.addf %3, %5 : vector<8x128xf32>
    %7 = math.tanh %6 : vector<8x128xf32>
    %cst_7 = arith.constant 1.000000e+00 : f32
    %8 = vector.broadcast %cst_7 : f32 to vector<8x128xf32>
    %9 = arith.addf %7, %8 : vector<8x128xf32>
    %c0_8 = arith.constant 0 : index
    %c0_9 = arith.constant 0 : index
    %10 = vector.load %arg4[%c0_8, %c0_9] : memref<8x128xf32, #tpu.memory_space<vmem>>, vector<8x128xf32>
    tpu.vector_store %arg4[%c0_8, %c0_9], %9 {strides = array<i32>} : memref<8x128xf32, #tpu.memory_space<vmem>>, vector<8x128xf32>,
    return
  }
  func.func @transform_0(%arg0: i32) -> (i32, i32, i32) {
    %c0_i32 = arith.constant 0 : i32
    %c0_i32_0 = arith.constant 0 : i32
    %c0_i32_1 = arith.constant 0 : i32
    %c0_i32_2 = arith.constant 0 : i32
    return %c0_i32, %c0_i32_0, %c0_i32_1 : i32, i32, i32
  }
  func.func @transform_1(%arg0: i32) -> (i32, i32) {
    %c0_i32 = arith.constant 0 : i32
    %c0_i32_0 = arith.constant 0 : i32
    %c0_i32_1 = arith.constant 0 : i32
    return %c0_i32, %c0_i32_0 : i32, i32
  }
  func.func @transform_2(%arg0: i32) -> (i32, i32) {
    %c0_i32 = arith.constant 0 : i32
    %c0_i32_0 = arith.constant 0 : i32
    %c0_i32_1 = arith.constant 0 : i32
    return %c0_i32, %c0_i32_0 : i32, i32
  }
  func.func @transform_3(%arg0: i32) -> (i32, i32) {
    %c0_i32 = arith.constant 0 : i32
    %c0_i32_0 = arith.constant 0 : i32
    %c0_i32_1 = arith.constant 0 : i32
    return %c0_i32, %c0_i32_0 : i32, i32
  }
}

</mosaic_0001>

<llo_original>
// kernel: tpu_custom_call.1
$region0: #{tpu_custom_call.1}
  #allocation0 [shape = 'u32[]', space=smem, size = 0x4, offset = 0x4, fixed_abs, tag = 'smem constant byte address 0x4 - core index']
  #allocation1 [shape = 'u32[144,128]{1,0:T(1,128)}', space=vmem, size = 0x12000, scoped, tag = 'internal scratch']
  %s0 = inlined_call_operand.vmem [shape: f32[4,36,128], index: 0, kind: input, shape index: {}]
  %s1 = inlined_call_operand.vmem [shape: f32[8,36], index: 1, kind: input, shape index: {}]
  %s2 = inlined_call_operand.vmem [shape: f32[8,1], index: 2, kind: input, shape index: {}]
  %s3 = inlined_call_operand.hbm [shape: f32[8,128], index: 3, kind: output, shape index: {}]
  %s4 = sld [smem:[#allocation0]]
  $region22: #{tpu_custom_call.1} parent=0
    _
  %s6 = ssub.s32 1, %s4
  %s7 = scalar_select 0, %s6, %s4
  $region1: #{tpu_custom_call.1} parent=0
    #allocation2 [shape = 'u8[4096]{0}', space=vmem, size = 0x1000, scoped, tag = 'output window, operand 0, single buffered']
    #allocation3 [shape = 's32[1]{0}', space=sflag, size = 0x4, scoped, tag = 'scoped memory for tpu_custom_call.1']
    %8 = vsyncpa [#allocation3], 0
    // Predicated region
    $region2: #{tpu_custom_call.1} parent=1 // pred_check
      _
    $region3: #{tpu_custom_call.1} parent=1 // pred_check_branch
      %10 = sbr.rel (0) target = $region5
    $region4: #{tpu_custom_call.1} parent=1 // pred_region
      _
    $region5: #{tpu_custom_call.1} parent=1 // pred_fallthru
      _
    // Predicated region
    $region6: #{tpu_custom_call.1} parent=1 // pred_check
      _
    $region7: #{tpu_custom_call.1} parent=1 // pred_check_branch
      %12 = sbr.rel (0) target = $region9
    $region8: #{tpu_custom_call.1} parent=1 // pred_region
      _
    $region9: #{tpu_custom_call.1} parent=1 // pred_fallthru
      _
    // Predicated region
    $region10: #{tpu_custom_call.1} parent=1 // pred_check
      _
    $region11: #{tpu_custom_call.1} parent=1 // pred_check_branch
      %14 = sbr.rel (0) target = $region13
    $region12: #{tpu_custom_call.1} parent=1 // pred_region
      _
    $region13: #{tpu_custom_call.1} parent=1 // pred_fallthru
      _
    %v15 = vld [vmem:[%s0] sm:$0xff]
    %v16 = vld [vmem:[%s0 + $0x8] sm:$0xff]
    %v17 = vld [vmem:[%s0 + $0x10] sm:$0xff]
    %v18 = vld [vmem:[%s0 + $0x18] sm:$0xff]
    %v19 = vld [vmem:[%s0 + $0x20] sm:$0xf]
    %v20 = vld [vmem:[%s0 + $0x28] sm:$0xff]
    %v21 = vld [vmem:[%s0 + $0x30] sm:$0xff]
    %v22 = vld [vmem:[%s0 + $0x38] sm:$0xff]
    %v23 = vld [vmem:[%s0 + $0x40] sm:$0xff]
    %v24 = vld [vmem:[%s0 + $0x48] sm:$0xf]
    %v25 = vld [vmem:[%s0 + $0x50] sm:$0xff]
    %v26 = vld [vmem:[%s0 + $0x58] sm:$0xff]
    %v27 = vld [vmem:[%s0 + $0x60] sm:$0xff]
    %v28 = vld [vmem:[%s0 + $0x68] sm:$0xff]
    %v29 = vld [vmem:[%s0 + $0x70] sm:$0xf]
    %v30 = vld [vmem:[%s0 + $0x78] sm:$0xff]
    %v31 = vld [vmem:[%s0 + $0x80] sm:$0xff]
    %v32 = vld [vmem:[%s0 + $0x88] sm:$0xff]
    %v33 = vld [vmem:[%s0 + $0x90] sm:$0xff]
    %v34 = vld [vmem:[%s0 + $0x98] sm:$0xf]
    %v35 = vmax.f32 %v15, %v20
    %v36 = vmax.f32 %v35, %v25
    %v37 = vmax.f32 %v36, %v30
    %v38 = vmax.f32 %v16, %v21
    %v39 = vmax.f32 %v38, %v26
    %v40 = vmax.f32 %v39, %v31
    %v41 = vmax.f32 %v17, %v22
    %v42 = vmax.f32 %v41, %v27
    %v43 = vmax.f32 %v42, %v32
    %v44 = vmax.f32 %v18, %v23
    %v45 = vmax.f32 %v44, %v28
    %v46 = vmax.f32 %v45, %v33
    %vm47 = vcmask 1043456
    %v48 = vsel %vm47, %v19, -inf
    %v49 = vsel %vm47, %v24, -inf
    %v50 = vmax.f32 %v48, %v49
    %v51 = vsel %vm47, %v29, -inf
    %v52 = vmax.f32 %v50, %v51
    %v53 = vsel %vm47, %v34, -inf
    %v54 = vmax.f32 %v52, %v53
    %v55 = vld [vmem:[%s1] sm:$0xff]
    %v56 = vld [vmem:[%s2] sm:$0xff]
    %58 = vset.pattern.permute.xlu0 0
    %59 = vperm.xlu0 %58, %v56
    %v60 = vpop.permute.xlu0 %59
    %vm62 = vcmask 293888
    %v64 = vsel %vm62, %v55, 0
    %v67 = vsel %vm47, %v54, 0
    %69 = vmatprep.subr.mxu0 0.0
    %70 = vmatpush1.msra.mxu0 %v37
    %71 = vmatprep.subr.mxu0 0.0
    %72 = vmatpush1.msra.mxu0 %v40
    %73 = vmatprep.subr.mxu0 0.0
    %74 = vmatpush1.msra.mxu0 %v43
    %75 = vmatprep.subr.mxu0 0.0
    %76 = vmatpush1.msra.mxu0 %v46
    %77 = vmatprep.subr.mxu0 0.0
    %78 = vmatpush1.msra.mxu0 %v67
    %79 = vmatprep.subr.mxu0 0.0
    %80 = vmatpush1.msra.mxu0 0.0
    %81 = vmatprep.subr.mxu0 0.0
    %82 = vmatpush1.msra.mxu0 0.0
    %83 = vmatprep.subr.mxu0 0.0
    %84 = vmatpush1.msra.mxu0 0.0
    %85 = vmatprep.subr.mxu0 0.0
    %86 = vmatpush1.msra.mxu0 0.0
    %87 = vmatprep.subr.mxu0 0.0
    %88 = vmatpush1.msra.mxu0 0.0
    %89 = vmatprep.subr.mxu0 0.0
    %90 = vmatpush1.msra.mxu0 0.0
    %91 = vmatprep.subr.mxu0 0.0
    %92 = vmatpush1.msra.mxu0 0.0
    %93 = vmatprep.subr.mxu0 0.0
    %94 = vmatpush1.msra.mxu0 0.0
    %95 = vmatprep.subr.mxu0 0.0
    %96 = vmatpush1.msra.mxu0 0.0
    %97 = vmatprep.subr.mxu0 0.0
    %98 = vmatpush1.msra.mxu0 0.0
    %99 = vmatprep.subr.mxu0 0.0
    %100 = vmatpush1.msra.mxu0 0.0
    %101 = vmatprep.subr.mxu0 0.0
    %102 = vmatpush1.msra.mxu0 0.0
    %103 = vmatprep.subr.mxu0 0.0
    %104 = vmatpush1.msra.mxu0 0.0
    %105 = vmatprep.subr.mxu0 0.0
    %106 = vmatpush1.msra.mxu0 0.0
    %107 = vmatprep.subr.mxu0 0.0
    %108 = vmatpush1.msra.mxu0 0.0
    %109 = vmatprep.subr.mxu0 0.0
    %110 = vmatpush1.msra.mxu0 0.0
    %111 = vmatprep.subr.mxu0 0.0
    %112 = vmatpush1.msra.mxu0 0.0
    %113 = vmatprep.subr.mxu0 0.0
    %114 = vmatpush1.msra.mxu0 0.0
    %115 = vmatprep.subr.mxu0 0.0
    %116 = vmatpush1.msra.mxu0 0.0
    %117 = vmatprep.subr.mxu0 0.0
    %118 = vmatpush1.msra.mxu0 0.0
    %119 = vmatprep.subr.mxu0 0.0
    %120 = vmatpush1.msra.mxu0 0.0
    %121 = vmatprep.subr.mxu0 0.0
    %122 = vmatpush1.msra.mxu0 0.0
    %123 = vmatprep.subr.mxu0 0.0
    %124 = vmatpush1.msra.mxu0 0.0
    %125 = vmatprep.subr.mxu0 0.0
    %126 = vmatpush1.msra.mxu0 0.0
    %127 = vmatprep.subr.mxu0 0.0
    %128 = vmatpush1.msra.mxu0 0.0
    %129 = vmatprep.subr.mxu0 0.0
    %130 = vmatpush1.msra.mxu0 0.0
    %131 = vmatprep.subr.mxu0 0.0
    %132 = vmatpush1.msra.mxu0 0.0
    %133 = vmatprep.mubr.f32.mxu0 0.0
    %134 = vmatmul.mubr.f32.gmra.mrb[0].mxu0 %v64
    %v135 = vpop.f32.mrb[0].mxu0
    %v136 = vadd.f32 %v60, %v135
    %v137 = vpop.f32.mrb[0].mxu0
    %138 = vdwg.mxu0
    %v139 = vtanh.pop %v136
    %v140 = vadd.f32 %v139, 1.0
    %141 = vst [vmem:[#allocation2] sm:$0xff] %v140
    // Predicated region
    $region14: #{tpu_custom_call.1} parent=1 // pred_check
      _
    $region15: #{tpu_custom_call.1} parent=1 // pred_check_branch
      %143 = sbr.rel (0) target = $region17
    $region16: #{tpu_custom_call.1} parent=1 // pred_region
      %s145 = ssub.s32 128, 128
      %146 = vsyncadd [#allocation3], %s145
      %s148 = sshll.u32 [#allocation2], 4
      %s149 = int_to_ptr.vmem [resolvable:$true] %s148
      %151 = dma.vmem_to_hbm [thread:$0]  %s149, 128, %s3, [#allocation3]
    $region17: #{tpu_custom_call.1} parent=1 // pred_fallthru
      _
    // Predicated region
    $region18: #{tpu_custom_call.1} parent=1 // pred_check
      _
    $region19: #{tpu_custom_call.1} parent=1 // pred_check_branch
      %153 = sbr.rel (0) target = $region21
    $region20: #{tpu_custom_call.1} parent=1 // pred_region
      %154 = dma.done [#allocation3], 128
    $region21: #{tpu_custom_call.1} parent=1 // pred_fallthru
      _
    %155 = vsyncpa [#allocation3], 1

</llo_original>
